<compile_context>
chip_gen: v5e
topology: v5e:2x2
jax: 0.10.0
libtpu: 0.0.40
codegen_flags: <defaults>
</compile_context>

<pallas_src>
import jax
import jax.numpy as jnp
from jax.experimental import pallas as pl
from jax.experimental.pallas import tpu as pltpu


# ---------------------------------------------------------------------------
# Kernel 1: label-side projections, run ONCE (hoisted out of the batch loop).
#   lt     = sigmoid(lab @ W_lt + b_lt)               (L, I)
#   la_ctx = sigmoid(lab @ W_la + b_la) * context     (L, I)
# The two label linears are fused into a single (H, 2I) matmul.
# ---------------------------------------------------------------------------
def _label_proj_kernel(lab_ref, w_lab_ref, b_lab_ref, ctx_ref, lt_ref, lactx_ref):
    inter = lt_ref.shape[1]
    proj = jnp.dot(lab_ref[...], w_lab_ref[...],
                   preferred_element_type=jnp.float32) + b_lab_ref[...]
    proj = jax.nn.sigmoid(proj)                            # (L, 2I) f32
    lt = proj[:, :inter]
    la = proj[:, inter:]
    lt_ref[...] = lt.astype(lt_ref.dtype)
    lactx_ref[...] = (la * ctx_ref[...]).astype(lactx_ref.dtype)


# ---------------------------------------------------------------------------
# Kernel 2: BAF fusion + classifier over a (batch-tile) x (seq-tile) grid.
# Grid = (B//Bt, S//tS); the sequence axis is a reduction ("arbitrary") that
# accumulates the fusion vector into a persistent VMEM f32 scratch.
# ---------------------------------------------------------------------------
def _baf_classifier_kernel(
    x_ref,        # (Bt, tS, H)  bf16  token hidden states tile
    lt_ref,       # (L, I)       bf16  hoisted label_transform activations
    lactx_ref,    # (L, I)       bf16  hoisted label_attention activations * context
    w_in_ref,     # (H, 2I)      bf16  [W_input_transform | W_input_attention]
    b_in_ref,     # (1, 2I)      f32
    w_pool_ref,   # (I, H)       bf16  pool (no bias)
    w_cls_ref,    # (H, NL)      bf16  classifier_fc weight
    b_cls_ref,    # (1, NL)      f32   classifier_fc bias
    probs_ref,    # out (Bt, NL) f32   sigmoid(logits)
    final_ref,    # out (Bt, H)  f32   final hidden states (CLS + fusion)
    fusion_acc,   # scratch VMEM (Bt, I) f32
    cls_acc,      # scratch VMEM (Bt, H) f32
):
    s = pl.program_id(1)
    n_s = pl.num_programs(1)
    bt, ts, hid = x_ref.shape
    inter = lt_ref.shape[1]

    x = x_ref[...]                                         # (Bt, tS, H) bf16

    @pl.when(s == 0)
    def _init():
        fusion_acc[...] = jnp.zeros_like(fusion_acc)
        cls_acc[...] = x[:, 0, :].astype(jnp.float32)      # CLS tokens (seq position 0)

    xf = x.reshape(bt * ts, hid)                           # MXU-friendly M = Bt*tS

    # fused input_transform / input_attention projection + sigmoid
    proj = jnp.dot(xf, w_in_ref[...],
                   preferred_element_type=jnp.float32) + b_in_ref[...]
    proj = jax.nn.sigmoid(proj)                            # (Bt*tS, 2I) f32
    it = proj[:, :inter]                                   # input_trans_states
    ia = proj[:, inter:]                                   # input_attention_states

    # attention_matrix[r, l] = sum_i ia[r, i] * context[i] * la[l, i]
    att = jax.lax.dot_general(
        ia.astype(jnp.bfloat16), lactx_ref[...],
        (((1,), (1,)), ((), ())),
        preferred_element_type=jnp.float32)                # (Bt*tS, L)

    # softmax over labels (numerically stable); reciprocal lowers to the EUP slot
    att = att - jnp.max(att, axis=-1, keepdims=True)
    e = jnp.exp(att)
    att = e * pl.reciprocal(jnp.sum(e, axis=-1, keepdims=True), approx=True)

    # fusion contribution of this sequence tile:
    #   fusion[b, i] += sum_s it[b, s, i] * (sum_l att[b, s, l] * lt[l, i])
    tmp = jnp.dot(att.astype(jnp.bfloat16), lt_ref[...],
                  preferred_element_type=jnp.float32)      # (Bt*tS, I)
    part = jnp.sum((it * tmp).reshape(bt, ts, inter), axis=1)   # (Bt, I)
    fusion_acc[...] += part

    @pl.when(s == n_s - 1)
    def _finalize():
        fused = jnp.dot(fusion_acc[...].astype(jnp.bfloat16), w_pool_ref[...],
                        preferred_element_type=jnp.float32)     # (Bt, H)
        final = cls_acc[...] + fused                            # CLS + fusion
        logits = jnp.dot(final.astype(jnp.bfloat16), w_cls_ref[...],
                         preferred_element_type=jnp.float32) + b_cls_ref[...]
        probs_ref[...] = jax.nn.sigmoid(logits)
        final_ref[...] = final


def _pick_seq_tile(seq_len, max_tile):
    if seq_len <= max_tile:
        return seq_len
    for t in range(max_tile, 0, -1):
        if seq_len % t == 0:
            return t
    return seq_len


def bert_baf_forward(input_hidden_states, label_hidden_states, params,
                     batch_tile=8, max_seq_tile=512):
    """BAF fusion + classifier head.

    input_hidden_states: (B, S, H) float32 encoder token states
    label_hidden_states: (L, H)    float32 encoder label [CLS] states
    Returns (probs (B, NL), final_hidden (B, H)), both float32.
    """
    B, S, H = input_hidden_states.shape
    L, _ = label_hidden_states.shape
    I = params["w_it"].shape[1]
    NL = params["w_cls"].shape[1]

    # --- weight prep (once, outside the kernels): fuse projections, cast bf16 ---
    w_in = jnp.concatenate([params["w_it"], params["w_ia"]], axis=1).astype(jnp.bfloat16)
    b_in = jnp.concatenate([params["b_it"], params["b_ia"]], axis=1)
    w_lab = jnp.concatenate([params["w_lt"], params["w_la"]], axis=1).astype(jnp.bfloat16)
    b_lab = jnp.concatenate([params["b_lt"], params["b_la"]], axis=1)
    w_pool = params["w_pool"].astype(jnp.bfloat16)
    w_cls = params["w_cls"].astype(jnp.bfloat16)
    b_cls = params["b_cls"]
    ctx = params["context"]

    lab_bf = label_hidden_states.astype(jnp.bfloat16)
    x_bf = input_hidden_states.astype(jnp.bfloat16)

    # --- 1) label projections: one tiny kernel, run once (batch-invariant) ------
    lt, la_ctx = pl.pallas_call(
        _label_proj_kernel,
        out_shape=(jax.ShapeDtypeStruct((L, I), jnp.bfloat16),
                   jax.ShapeDtypeStruct((L, I), jnp.bfloat16)),
    )(lab_bf, w_lab, b_lab, ctx)

    # --- 2) batched, S-tiled BAF fusion + classifier -----------------------------
    Bt = min(batch_tile, B)
    pad_b = (-B) % Bt
    if pad_b:
        x_bf = jnp.pad(x_bf, ((0, pad_b), (0, 0), (0, 0)))
    nB = (B + pad_b) // Bt

    tS = _pick_seq_tile(S, max_seq_tile)   # keeps (S, I) intermediates VMEM-friendly
    nS = S // tS

    grid_spec = pltpu.PrefetchScalarGridSpec(
        num_scalar_prefetch=0,
        grid=(nB, nS),
        in_specs=[
            pl.BlockSpec((Bt, tS, H), lambda b, s: (b, s, 0)),   # x tile
            pl.BlockSpec((L, I), lambda b, s: (0, 0)),           # lt (hoisted)
            pl.BlockSpec((L, I), lambda b, s: (0, 0)),           # la * ctx (hoisted)
            pl.BlockSpec((H, 2 * I), lambda b, s: (0, 0)),       # fused input weights
            pl.BlockSpec((1, 2 * I), lambda b, s: (0, 0)),       # fused input biases
            pl.BlockSpec((I, H), lambda b, s: (0, 0)),           # pool
            pl.BlockSpec((H, NL), lambda b, s: (0, 0)),          # classifier W
            pl.BlockSpec((1, NL), lambda b, s: (0, 0)),          # classifier b
        ],
        out_specs=[
            pl.BlockSpec((Bt, NL), lambda b, s: (b, 0)),
            pl.BlockSpec((Bt, H), lambda b, s: (b, 0)),
        ],
        scratch_shapes=[
            pltpu.VMEM((Bt, I), jnp.float32),   # fusion accumulator (over S tiles)
            pltpu.VMEM((Bt, H), jnp.float32),   # CLS stash from the s==0 tile
        ],
    )

    probs, final = pl.pallas_call(
        _baf_classifier_kernel,
        out_shape=(
            jax.ShapeDtypeStruct((nB * Bt, NL), jnp.float32),
            jax.ShapeDtypeStruct((nB * Bt, H), jnp.float32),
        ),
        grid_spec=grid_spec,
        compiler_params=pltpu.CompilerParams(
            dimension_semantics=("parallel", "arbitrary")),
    )(x_bf, lt, la_ctx, w_in, b_in, w_pool, w_cls, b_cls)

    return probs[:B], final[:B]


def init_params(key, hidden_dim, intermediate_dim, num_labels):
    """Deterministic parameter init (shapes match the PyTorch module)."""
    ks = jax.random.split(key, 12)
    H, I, NL = hidden_dim, intermediate_dim, num_labels
    scale_hi = 1.0 / jnp.sqrt(H)
    scale_ih = 1.0 / jnp.sqrt(I)
    u = lambda k, shape, s: jax.random.uniform(k, shape, jnp.float32, -s, s)
    return {
        # Linear weights stored pre-transposed as (in, out) for `x @ W + b`.
        "w_it": u(ks[0], (H, I), scale_hi), "b_it": u(ks[1], (1, I), scale_hi),
        "w_lt": u(ks[2], (H, I), scale_hi), "b_lt": u(ks[3], (1, I), scale_hi),
        "w_ia": u(ks[4], (H, I), scale_hi), "b_ia": u(ks[5], (1, I), scale_hi),
        "w_la": u(ks[6], (H, I), scale_hi), "b_la": u(ks[7], (1, I), scale_hi),
        "context": jax.random.uniform(ks[8], (1, I), jnp.float32, 0.0, 1.0),
        "w_pool": u(ks[9], (I, H), scale_ih),
        "w_cls": u(ks[10], (H, NL), scale_hi), "b_cls": u(ks[11], (1, NL), scale_hi),
    }


def _reference_forward(x, lab, p):
    """Pure-JAX f32 reference mirroring the PyTorch module (dropout = identity)."""
    it = jax.nn.sigmoid(x @ p["w_it"] + p["b_it"])          # (B, S, I)
    lt = jax.nn.sigmoid(lab @ p["w_lt"] + p["b_lt"])        # (L, I)
    ia = jax.nn.sigmoid(x @ p["w_ia"] + p["b_ia"])          # (B, S, I)
    la = jax.nn.sigmoid(lab @ p["w_la"] + p["b_la"])        # (L, I)
    att = jnp.einsum("bsi,li->bsl", ia * p["context"], la)  # (B, S, L)
    att = jax.nn.softmax(att, axis=-1)
    tmp = jnp.einsum("bsl,li->bsi", att, lt)
    fusion = jnp.sum(it * tmp, axis=1)                      # (B, I)
    fused = fusion @ p["w_pool"]                            # (B, H)
    final = x[:, 0, :] + fused
    logits = final @ p["w_cls"] + p["b_cls"]
    return jax.nn.sigmoid(logits), final


if __name__ == "__main__":
    B, S, H, I, NL = 2, 8, 32, 16, 4   # batch, seq, hidden, intermediate, num_labels

    key = jax.random.PRNGKey(0)
    k_p, k_x, k_l = jax.random.split(key, 3)
    params = init_params(k_p, H, I, NL)

    # Synthetic encoder outputs (what self.encoder(...) would produce).
    input_hidden_states = jax.random.normal(k_x, (B, S, H), jnp.float32)
    label_hidden_states = jax.random.normal(k_l, (NL, H), jnp.float32)

    probs, final = bert_baf_forward(input_hidden_states, label_hidden_states, params)
    jax.block_until_ready((probs, final))

    assert probs.shape == (B, NL) and final.shape == (B, H)

    # Loose correctness check (kernel uses bf16 matmul operands, f32 accumulation).
    ref_probs, ref_final = _reference_forward(input_hidden_states, label_hidden_states, params)
    assert jnp.allclose(probs, ref_probs, atol=1e-1, rtol=1e-1), \
        float(jnp.max(jnp.abs(probs - ref_probs)))
    assert jnp.allclose(final, ref_final, atol=1e-1, rtol=1e-1), \
        float(jnp.max(jnp.abs(final - ref_final)))

    print("KERNEL_OK")
</pallas_src>

<mosaic_0001>
module attributes {stable_mosaic.version = 11 : i64} {
  func.func @_label_proj_kernel(%arg0: memref<4x32xbf16, #tpu.memory_space<vmem>>, %arg1: memref<32x32xbf16, #tpu.memory_space<vmem>>, %arg2: memref<1x32xf32, #tpu.memory_space<vmem>>, %arg3: memref<1x16xf32, #tpu.memory_space<vmem>>, %arg4: memref<4x16xbf16, #tpu.memory_space<vmem>>, %arg5: memref<4x16xbf16, #tpu.memory_space<vmem>>) attributes {dimension_semantics = [], scalar_prefetch = 0 : i64, scratch_operands = 0 : i64, tpu.core_type = #tpu.core_type<tc>} {
    %c0 = arith.constant 0 : index
    %c0_0 = arith.constant 0 : index
    %0 = vector.load %arg0[%c0, %c0_0] : memref<4x32xbf16, #tpu.memory_space<vmem>>, vector<4x32xbf16>
    %c0_1 = arith.constant 0 : index
    %c0_2 = arith.constant 0 : index
    %1 = vector.load %arg1[%c0_1, %c0_2] : memref<32x32xbf16, #tpu.memory_space<vmem>>, vector<32x32xbf16>
    %cst = arith.constant dense<0.000000e+00> : vector<4x32xf32>
    %2 = tpu.matmul %0, %1, %cst {dimension_numbers = #tpu.dot_dimension_numbers<[1], [0], [0], [1], [0, 0, 1, 1], [], []>} : vector<4x32xbf16>, vector<32x32xbf16>, vector<4x32xf32> -> vector<4x32xf32>
    %c0_3 = arith.constant 0 : index
    %c0_4 = arith.constant 0 : index
    %3 = vector.load %arg2[%c0_3, %c0_4] : memref<1x32xf32, #tpu.memory_space<vmem>>, vector<1x32xf32>
    %4 = vector.broadcast %3 : vector<1x32xf32> to vector<4x32xf32>
    %5 = arith.addf %2, %4 : vector<4x32xf32>
    %6 = arith.negf %5 : vector<4x32xf32>
    %7 = math.exp %6 : vector<4x32xf32>
    %cst_5 = arith.constant 1.000000e+00 : f32
    %8 = vector.broadcast %cst_5 : f32 to vector<4x32xf32>
    %9 = arith.addf %8, %7 : vector<4x32xf32>
    %10 = arith.divf %8, %9 : vector<4x32xf32>
    %11 = vector.extract_strided_slice %10 {offsets = [0, 0], sizes = [4, 16], strides = [1, 1]} : vector<4x32xf32> to vector<4x16xf32>
    %12 = vector.extract_strided_slice %10 {offsets = [0, 16], sizes = [4, 16], strides = [1, 1]} : vector<4x32xf32> to vector<4x16xf32>
    %13 = arith.truncf %11 : vector<4x16xf32> to vector<4x16xbf16>
    %c0_6 = arith.constant 0 : index
    %c0_7 = arith.constant 0 : index
    %14 = vector.load %arg4[%c0_6, %c0_7] : memref<4x16xbf16, #tpu.memory_space<vmem>>, vector<4x16xbf16>
    tpu.vector_store %arg4[%c0_6, %c0_7], %13 {strides = array<i32>} : memref<4x16xbf16, #tpu.memory_space<vmem>>, vector<4x16xbf16>,
    %c0_8 = arith.constant 0 : index
    %c0_9 = arith.constant 0 : index
    %15 = vector.load %arg3[%c0_8, %c0_9] : memref<1x16xf32, #tpu.memory_space<vmem>>, vector<1x16xf32>
    %16 = vector.broadcast %15 : vector<1x16xf32> to vector<4x16xf32>
    %17 = arith.mulf %12, %16 : vector<4x16xf32>
    %18 = arith.truncf %17 : vector<4x16xf32> to vector<4x16xbf16>
    %c0_10 = arith.constant 0 : index
    %c0_11 = arith.constant 0 : index
    %19 = vector.load %arg5[%c0_10, %c0_11] : memref<4x16xbf16, #tpu.memory_space<vmem>>, vector<4x16xbf16>
    tpu.vector_store %arg5[%c0_10, %c0_11], %18 {strides = array<i32>} : memref<4x16xbf16, #tpu.memory_space<vmem>>, vector<4x16xbf16>,
    return
  }
}

</mosaic_0001>

<llo_original>
// kernel: tpu_custom_call.1
$region0: #{tpu_custom_call.1}
  #allocation0 [shape = 'u32[]', space=smem, size = 0x4, offset = 0x4, fixed_abs, tag = 'smem constant byte address 0x4 - core index']
  #allocation1 [shape = 'u32[72,128]{1,0:T(1,128)}', space=vmem, size = 0x9000, scoped, tag = 'internal scratch']
  %s0 = inlined_call_operand.hbm [shape: bf16[4,32], index: 0, kind: input, shape index: {}]
  %s1 = inlined_call_operand.hbm [shape: bf16[32,32], index: 1, kind: input, shape index: {}]
  %s2 = inlined_call_operand.vmem [shape: f32[1,32], index: 2, kind: input, shape index: {}]
  %s3 = inlined_call_operand.vmem [shape: f32[1,16], index: 3, kind: input, shape index: {}]
  %s4 = inlined_call_operand.hbm [shape: bf16[4,16], index: 4, kind: output, shape index: {0}]
  %s5 = inlined_call_operand.hbm [shape: bf16[4,16], index: 5, kind: output, shape index: {1}]
  %6 = xla_tuple %s4, %s5
  %s7 = sld [smem:[#allocation0]]
  $region42: #{tpu_custom_call.1} parent=0
    _
  %s9 = ssub.s32 1, %s7
  %s10 = scalar_select 0, %s9, %s7
  $region1: #{tpu_custom_call.1} parent=0
    #allocation2 [shape = 'u8[1024]{0}', space=vmem, size = 0x400, scoped, tag = 'input window, operand 0, single buffered']
    #allocation3 [shape = 's32[1]{0}', space=sflag, size = 0x4, scoped, tag = 'scoped memory for tpu_custom_call.1']
    #allocation4 [shape = 's32[1]{0}', space=sflag, size = 0x4, scoped, tag = 'scoped memory for tpu_custom_call.1']
    #allocation5 [shape = 'u8[8192]{0}', space=vmem, size = 0x2000, scoped, tag = 'input window, operand 1, single buffered']
    #allocation6 [shape = 's32[1]{0}', space=sflag, size = 0x4, scoped, tag = 'scoped memory for tpu_custom_call.1']
    #allocation7 [shape = 'u8[1024]{0}', space=vmem, size = 0x400, scoped, tag = 'output window, operand 0, single buffered']
    #allocation8 [shape = 'u8[1024]{0}', space=vmem, size = 0x400, scoped, tag = 'output window, operand 1, single buffered']
    #allocation9 [shape = 's32[1]{0}', space=sflag, size = 0x4, scoped, tag = 'scoped memory for tpu_custom_call.1']
    %11 = vsyncpa [#allocation3], 0
    %12 = vsyncpa [#allocation6], 0
    %13 = vsyncpa [#allocation4], 0
    %14 = vsyncpa [#allocation9], 0
    // Predicated region
    $region2: #{tpu_custom_call.1} parent=1 // pred_check
      _
    $region3: #{tpu_custom_call.1} parent=1 // pred_check_branch
      %16 = sbr.rel (0) target = $region5
    $region4: #{tpu_custom_call.1} parent=1 // pred_region
      %18 = vsyncadd [#allocation3], 0
      %s20 = sshll.u32 %s0, 4
      %s21 = int_to_ptr.hbm [resolvable:$true] %s20
      %s22 = sshll.u32 [#allocation2], 4
      %s23 = int_to_ptr.vmem [resolvable:$true] %s22
      %25 = dma.hbm_to_vmem [thread:$0]  %s21, 32, %s23, [#allocation3]
    $region5: #{tpu_custom_call.1} parent=1 // pred_fallthru
      _
    // Predicated region
    $region6: #{tpu_custom_call.1} parent=1 // pred_check
      _
    $region7: #{tpu_custom_call.1} parent=1 // pred_check_branch
      %27 = sbr.rel (0) target = $region9
    $region8: #{tpu_custom_call.1} parent=1 // pred_region
      %29 = vsyncadd [#allocation6], 0
      %s30 = sshll.u32 %s1, 4
      %s31 = int_to_ptr.hbm [resolvable:$true] %s30
      %s32 = sshll.u32 [#allocation5], 4
      %s33 = int_to_ptr.vmem [resolvable:$true] %s32
      %38 = dma.hbm_to_vmem [thread:$0]  %s31, 256, %s33, [#allocation6], 64, 64, 4
    $region9: #{tpu_custom_call.1} parent=1 // pred_fallthru
      _
    // Predicated region
    $region10: #{tpu_custom_call.1} parent=1 // pred_check
      _
    $region11: #{tpu_custom_call.1} parent=1 // pred_check_branch
      %40 = sbr.rel (0) target = $region13
    $region12: #{tpu_custom_call.1} parent=1 // pred_region
      _
    $region13: #{tpu_custom_call.1} parent=1 // pred_fallthru
      _
    // Predicated region
    $region14: #{tpu_custom_call.1} parent=1 // pred_check
      _
    $region15: #{tpu_custom_call.1} parent=1 // pred_check_branch
      %42 = sbr.rel (0) target = $region17
    $region16: #{tpu_custom_call.1} parent=1 // pred_region
      _
    $region17: #{tpu_custom_call.1} parent=1 // pred_fallthru
      _
    // Predicated region
    $region18: #{tpu_custom_call.1} parent=1 // pred_check
      _
    $region19: #{tpu_custom_call.1} parent=1 // pred_check_branch
      %44 = sbr.rel (0) target = $region21
    $region20: #{tpu_custom_call.1} parent=1 // pred_region
      %46 = dma.done [#allocation3], 32
    $region21: #{tpu_custom_call.1} parent=1 // pred_fallthru
      _
    // Predicated region
    $region22: #{tpu_custom_call.1} parent=1 // pred_check
      _
    $region23: #{tpu_custom_call.1} parent=1 // pred_check_branch
      %48 = sbr.rel (0) target = $region25
    $region24: #{tpu_custom_call.1} parent=1 // pred_region
      %50 = dma.done [#allocation6], 256
    $region25: #{tpu_custom_call.1} parent=1 // pred_fallthru
      _
    %v52 = vld [vmem:[#allocation2] sm:$0x3]
    %v53 = vld [vmem:[#allocation5] sm:$0xf]
    %v54 = vld [vmem:[#allocation5 + $0x4] sm:$0xf]
    %v55 = vld [vmem:[#allocation5 + $0x8] sm:$0xf]
    %v56 = vld [vmem:[#allocation5 + $0xc] sm:$0xf]
    %v57 = vld [vmem:[%s2] sm:$0x1]
    %v59 = vperm.slane %v57, 0
    %v65 = vunpack.c.l.b16 %v53
    %v66 = vunpack.c.l.b16 %v54
    %v67 = vunpack.c.l.b16 %v55
    %v68 = vunpack.c.l.b16 %v56
    %v69 = vpack.c.b16 %v66, %v65
    %v70 = vpack.c.b16 %v68, %v67
    %vm73 = vcmask 261120
    %v75 = vsel %vm73, %v52, 0
    %77 = vmatpush.bf16.msra.mxu0 0
    %78 = vmatpush.bf16.msra.mxu0 0
    %79 = vmatpush.bf16.msra.mxu0 0
    %80 = vmatpush.bf16.msra.mxu0 0
    %81 = vmatpush.bf16.msra.mxu0 0
    %82 = vmatpush.bf16.msra.mxu0 0
    %83 = vmatpush.bf16.msra.mxu0 %v70
    %84 = vmatpush.bf16.msra.mxu0 %v69
    %85 = vmatmul.bf16.gmra.mxu0 %v75
    %v86 = vpop.f32.mrf.mxu0
    %v87 = vadd.f32 %v59, %v86
    %v88 = vpop.f32.mrf.mxu0
    %89 = vdwg.mxu0
    %v90 = vxor.u32 %v87, 2147483648
    %v91 = vmul.f32 %v90, 1.442695
    %v92 = vpow.pop %v91
    %v93 = vadd.f32 %v92, 1.0
    %v94 = vrcp.pop %v93
    %v95 = vmul.f32 %v93, %v94
    %v96 = vsub.f32 1.0, %v95
    %v97 = vmul.f32 %v94, %v96
    %v98 = vadd.f32 %v94, %v97
    %vm99 = vweird.f32 %v93
    %vm100 = vweird.f32 %v94
    %vm101 = vmor %vm99, %vm100
    %v102 = vsel %vm101, %v94, %v98
    %v103 = vand.u32 2147483647, %v93
    %vm104 = vcmp.eq.f32.partialorder %v103, 8.507059e+37
    %v105 = vand.u32 %v93, 2147483648
    %v106 = vor.u32 1.1754944e-38, %v105
    %v107 = vsel %vm104, %v106, %v102
    %v108 = vmul.f32 1.0, %v107
    %v109 = vpack.c.bf16 %v108, %v108
    %vm110 = vcmask 123904
    %111 = vst.msk [vmem:[#allocation7] sm:$0x3] %vm110, %v109
    %v112 = vld [vmem:[%s3] sm:$0x1]
    %v114 = vperm.slane %v112, 0
    %115 = vrot.lane.b32.xlu0 %v114, 16
    %v116 = vpop.permute.xlu0 %115
    %v118 = vmul.f32 %v108, %v116
    %v119 = vpack.c.bf16 %v118, %v118
    %v121 = vrot.slane %v119, 2
    %vm122 = vcmask 1041408
    %v125 = vsel %vm122, %v119, %v121
    %127 = vrot.lane.b32.xlu0 %v125, 112
    %v128 = vpop.permute.xlu0 %127
    %130 = vst.msk [vmem:[#allocation8] sm:$0x3] %vm110, %v128
    // Predicated region
    $region26: #{tpu_custom_call.1} parent=1 // pred_check
      _
    $region27: #{tpu_custom_call.1} parent=1 // pred_check_branch
      %132 = sbr.rel (0) target = $region29
    $region28: #{tpu_custom_call.1} parent=1 // pred_region
      %134 = vsyncadd [#allocation4], 0
      %s136 = sshll.u32 [#allocation7], 4
      %s137 = int_to_ptr.vmem [resolvable:$true] %s136
      %s138 = sshll.u32 %s4, 4
      %s139 = int_to_ptr.hbm [resolvable:$true] %s138
      %141 = dma.vmem_to_hbm [thread:$0]  %s137, 32, %s139, [#allocation4]
    $region29: #{tpu_custom_call.1} parent=1 // pred_fallthru
      _
    // Predicated region
    $region30: #{tpu_custom_call.1} parent=1 // pred_check
      _
    $region31: #{tpu_custom_call.1} parent=1 // pred_check_branch
      %143 = sbr.rel (0) target = $region33
    $region32: #{tpu_custom_call.1} parent=1 // pred_region
      %145 = vsyncadd [#allocation9], 0
      %s147 = sshll.u32 [#allocation8], 4
      %s148 = int_to_ptr.vmem [resolvable:$true] %s147
      %s149 = sshll.u32 %s5, 4
      %s150 = int_to_ptr.hbm [resolvable:$true] %s149
      %152 = dma.vmem_to_hbm [thread:$0]  %s148, 32, %s150, [#allocation9]
    $region33: #{tpu_custom_call.1} parent=1 // pred_fallthru
      _
    // Predicated region
    $region34: #{tpu_custom_call.1} parent=1 // pred_check
      _
    $region35: #{tpu_custom_call.1} parent=1 // pred_check_branch
      %154 = sbr.rel (0) target = $region37
    $region36: #{tpu_custom_call.1} parent=1 // pred_region
      %156 = dma.done [#allocation4], 32
    $region37: #{tpu_custom_call.1} parent=1 // pred_fallthru
      _
    // Predicated region
    $region38: #{tpu_custom_call.1} parent=1 // pred_check
      _
    $region39: #{tpu_custom_call.1} parent=1 // pred_check_branch
      %158 = sbr.rel (0) target = $region41
    $region40: #{tpu_custom_call.1} parent=1 // pred_region
      %160 = dma.done [#allocation9], 32
    $region41: #{tpu_custom_call.1} parent=1 // pred_fallthru
      _
    %161 = vsyncpa [#allocation3], 1
    %162 = vsyncpa [#allocation6], 1
    %163 = vsyncpa [#allocation4], 1
    %164 = vsyncpa [#allocation9], 1

</llo_original>
